<compile_context>
chip_gen: v7x
topology: tpu7x:2x2x1
jax: 0.10.0
libtpu: 0.0.40
codegen_flags: <defaults>
</compile_context>

<pallas_src>
import jax
import jax.numpy as jnp
from jax.experimental import pallas as pl
from jax.experimental.pallas import tpu as pltpu


def _rup(v, m):
    return ((v + m - 1) // m) * m


def _cdiv(a, b):
    return -(-a // b)


def _largest_tile(total, cap, unit):
    """Largest multiple of `unit` that divides `total` and is <= max(cap, unit)."""
    cap = max(cap, unit)
    best = unit
    t = unit
    while t <= min(total, cap):
        if total % t == 0:
            best = t
        t += unit
    return best


def _vmem_budget_bytes(frac=0.8, fallback_capacity=64 << 20):
    """Per-generation VMEM budget: a fraction of physical capacity."""
    try:
        cap = pltpu.get_tpu_info().vmem_capacity_bytes
    except Exception:
        cap = fallback_capacity  # conservative (v7x-sized) fallback
    return int(frac * cap)


def _mlp_kernel(x_ref, w1_ref, b1_ref, w2_ref, b2_ref, o_ref, h_ref):
    # Hidden activation is computed once per batch tile (Cout-tile index 0) and
    # cached in VMEM scratch so additional Cout tiles reuse it.
    @pl.when(pl.program_id(1) == 0)
    def _():
        x = x_ref[...].astype(w1_ref.dtype)          # f32 -> bf16 on the VPU
        h = jnp.dot(x, w1_ref[...], preferred_element_type=jnp.float32)
        h_ref[...] = jnp.maximum(h + b1_ref[...], 0.0)   # f32 bias + ReLU

    y = jnp.dot(h_ref[...].astype(w2_ref.dtype), w2_ref[...],
                preferred_element_type=jnp.float32)
    o_ref[...] = (y + b2_ref[...]).astype(o_ref.dtype)


def pack_mlp_params(w1, b1, w2, b2, *, mxu_dtype=jnp.bfloat16):
    """One-time (init-time) pad + cast of the MLP parameters.

    w1: (Cin, H); b1: (H,); w2: (H, Cout); b2: (Cout,).
    Feature dims H/Cout are padded to multiples of 128 (lane-dense, exact
    math: padded rows/cols are zero and padded outputs are sliced off).
    Cin is deliberately NOT padded so the per-tile x DMA stays minimal.
    """
    Cin, H = w1.shape
    H_w, Cout = w2.shape
    assert H_w == H and b1.shape == (H,) and b2.shape == (Cout,)
    H_p = _rup(H, 128)
    Cout_p = _rup(Cout, 128)
    w1_p = jnp.pad(w1, ((0, 0), (0, H_p - H))).astype(mxu_dtype)
    b1_p = jnp.pad(b1, (0, H_p - H)).astype(jnp.float32).reshape(1, H_p)
    w2_p = jnp.pad(w2, ((0, H_p - H), (0, Cout_p - Cout))).astype(mxu_dtype)
    b2_p = jnp.pad(b2, (0, Cout_p - Cout)).astype(jnp.float32).reshape(1, Cout_p)
    return dict(w1=w1_p, b1=b1_p, w2=w2_p, b2=b2_p, Cin=Cin, H=H, Cout=Cout)


def mlp_forward_packed(x, params, *, tm=512, tn=512):
    """x: (B, Cin) f32; params: output of pack_mlp_params."""
    B, Cin = x.shape
    assert Cin == params["Cin"]
    w1_p, b1_p, w2_p, b2_p = params["w1"], params["b1"], params["w2"], params["b2"]
    H_p = w1_p.shape[1]
    Cout_p = w2_p.shape[1]
    Cout = params["Cout"]

    itm = jnp.dtype(w1_p.dtype).itemsize
    out_dtype = x.dtype
    out_itm = jnp.dtype(out_dtype).itemsize
    x_itm = jnp.dtype(x.dtype).itemsize

    budget = _vmem_budget_bytes()

    # Cout tile: largest multiple of 128 dividing Cout_p, capped at `tn`.
    TN = _largest_tile(Cout_p, _rup(tn, 128), 128)

    # Batch tile: at least 2 grid steps whenever B > 8 (keeps both TensorCores
    # busy on 2-TC chips), never larger than `tm`, rounded to the sublane (8).
    TM = max(8, min(_rup(tm, 8), _rup(_cdiv(_rup(B, 8), 2), 8)))

    def resident(TM_, TN_):
        n_w2_buf = 1 if TN_ == Cout_p else 2
        return (
            2 * TM_ * Cin * x_itm                       # x tile (double-buffered)
            + 2 * TM_ * TN_ * out_itm                   # out tile (double-buffered)
            + Cin * H_p * itm + H_p * 4                 # w1/b1 (single-buffered)
            + n_w2_buf * (H_p * TN_ * itm + TN_ * 4)    # w2/b2 tiles
            + TM_ * H_p * 4                             # f32 hidden scratch
            + TM_ * TN_ * 4                             # f32 second-matmul result
        )

    # Shrink tiles until the resident footprint fits the VMEM budget.
    while resident(TM, TN) > budget and (TM > 8 or TN > 128):
        if TM > 8:
            TM = max(8, _rup(TM // 2, 8))
        else:
            TN = _largest_tile(Cout_p, TN // 2, 128)
    # TODO(synk): if Cin*H_p ever exceeds any resident-w1 plan, add an
    # 'arbitrary' K grid axis with an f32 accumulator (not needed at MLP sizes).

    B_p = _rup(B, TM)
    grid = (B_p // TM, Cout_p // TN)
    grid_n = grid[1]

    # Batch-only zero padding; no Cin padding, no wrapper-side dtype cast.
    x_p = jnp.pad(x, ((0, B_p - B), (0, 0)))

    res = resident(TM, TN)
    vmem_limit = int(min(budget, max(int(1.5 * res), 32 << 20)))

    cost = pl.CostEstimate(
        flops=2 * B_p * Cin * H_p + 2 * B_p * H_p * Cout_p,
        transcendentals=0,
        bytes_accessed=(
            B_p * Cin * x_itm
            + (w1_p.size + w2_p.size) * itm
            + (b1_p.size + b2_p.size) * 4
            + B_p * Cout_p * out_itm
        ),
    )

    resident_mode = pl.Buffered(1)                       # constant-index blocks
    w2_mode = pl.Buffered(1) if grid_n == 1 else None    # tiled -> default 2 bufs

    def bs(shape, idx, mode=None):
        if mode is None:
            return pl.BlockSpec(shape, idx)
        return pl.BlockSpec(shape, idx, pipeline_mode=mode)

    out_p = pl.pallas_call(
        _mlp_kernel,
        out_shape=jax.ShapeDtypeStruct((B_p, Cout_p), out_dtype),
        grid_spec=pltpu.PrefetchScalarGridSpec(
            num_scalar_prefetch=0,
            grid=grid,
            in_specs=[
                bs((TM, Cin), lambda i, j: (i, 0)),                   # x: batch-tiled
                bs((Cin, H_p), lambda i, j: (0, 0), resident_mode),   # w1: resident
                bs((1, H_p), lambda i, j: (0, 0), resident_mode),     # b1: resident
                bs((H_p, TN), lambda i, j: (0, j), w2_mode),          # w2: Cout-tiled
                bs((1, TN), lambda i, j: (0, j), w2_mode),            # b2: Cout-tiled
            ],
            out_specs=bs((TM, TN), lambda i, j: (i, j)),
            scratch_shapes=[pltpu.VMEM((TM, H_p), jnp.float32)],      # cached hidden
        ),
        compiler_params=pltpu.CompilerParams(
            # Batch tiles are independent (megacore-shardable); the Cout axis
            # reuses the cached hidden activation so it must stay sequential.
            dimension_semantics=("parallel", "arbitrary"),
            vmem_limit_bytes=vmem_limit,
        ),
        cost_estimate=cost,
    )(x_p, w1_p, b1_p, w2_p, b2_p)

    return out_p[:B, :Cout]


def mlp_forward(x, w1, b1, w2, b2, **kwargs):
    """Convenience wrapper: pack params then run (packing should normally be
    hoisted to init time via pack_mlp_params for repeated inference)."""
    return mlp_forward_packed(x, pack_mlp_params(w1, b1, w2, b2), **kwargs)


if __name__ == "__main__":
    # Small shapes consistent with the module: MLP(in=16, hidden=32, out=8).
    batch, in_channels, hidden_channels, out_channels = 16, 16, 32, 8

    key = jax.random.PRNGKey(0)
    kx, kw1, kb1, kw2, kb2 = jax.random.split(key, 5)

    x = jax.random.normal(kx, (batch, in_channels), dtype=jnp.float32)
    w1 = jax.random.normal(kw1, (in_channels, hidden_channels),
                           dtype=jnp.float32) * (1.0 / jnp.sqrt(in_channels))
    b1 = jax.random.normal(kb1, (hidden_channels,), dtype=jnp.float32) * 0.01
    w2 = jax.random.normal(kw2, (hidden_channels, out_channels),
                           dtype=jnp.float32) * (1.0 / jnp.sqrt(hidden_channels))
    b2 = jax.random.normal(kb2, (out_channels,), dtype=jnp.float32) * 0.01

    # One-time packing (init-time), then forward.  With the default tile
    # heuristics this gives a 2-step batch grid even at batch=16, exercising
    # the pipelined / 2-TensorCore path.
    params = pack_mlp_params(w1, b1, w2, b2)
    out = mlp_forward_packed(x, params)
    out = jax.block_until_ready(out)
    assert out.shape == (batch, out_channels)

    # Reference 1: same bf16 MXU operands + f32 accumulation (tight check).
    xb = x.astype(jnp.bfloat16)
    w1b = w1.astype(jnp.bfloat16)
    w2b = w2.astype(jnp.bfloat16)
    h_ref = jnp.maximum(
        jnp.dot(xb, w1b, preferred_element_type=jnp.float32) + b1, 0.0)
    ref_bf16 = jnp.dot(h_ref.astype(jnp.bfloat16), w2b,
                       preferred_element_type=jnp.float32) + b2
    assert jnp.allclose(out, ref_bf16.astype(out.dtype), atol=2e-3, rtol=2e-3)

    # Reference 2: pure f32 forward (loose semantic check).
    ref_f32 = jnp.maximum(x @ w1 + b1, 0.0) @ w2 + b2
    assert jnp.allclose(out, ref_f32, atol=5e-2, rtol=5e-2)

    print("KERNEL_OK")
</pallas_src>

<mosaic_0001>
module attributes {stable_mosaic.version = 11 : i64} {
  func.func @_mlp_kernel(%arg0: i32, %arg1: i32, %arg2: memref<8x16xf32, #tpu.memory_space<vmem>>, %arg3: memref<16x128xbf16, #tpu.memory_space<vmem>>, %arg4: memref<1x128xf32, #tpu.memory_space<vmem>>, %arg5: memref<128x128xbf16, #tpu.memory_space<vmem>>, %arg6: memref<1x128xf32, #tpu.memory_space<vmem>>, %arg7: memref<8x128xf32, #tpu.memory_space<vmem>>, %arg8: memref<8x128xf32, #tpu.memory_space<vmem>>) attributes {dimension_semantics = [#tpu.dimension_semantics<parallel>, #tpu.dimension_semantics<arbitrary>], iteration_bounds = array<i64: 2, 1>, scalar_prefetch = 0 : i64, scratch_operands = 1 : i64, tpu.core_type = #tpu.core_type<tc>, window_params = [{transform_indices = @transform_0, window_bounds = array<i64: 8, 16>}, {pipeline_mode = #tpu.pipeline_mode<synchronous>, transform_indices = @transform_1, window_bounds = array<i64: 16, 128>}, {pipeline_mode = #tpu.pipeline_mode<synchronous>, transform_indices = @transform_2, window_bounds = array<i64: 1, 128>}, {pipeline_mode = #tpu.pipeline_mode<synchronous>, transform_indices = @transform_3, window_bounds = array<i64: 128, 128>}, {pipeline_mode = #tpu.pipeline_mode<synchronous>, transform_indices = @transform_4, window_bounds = array<i64: 1, 128>}, {transform_indices = @transform_5, window_bounds = array<i64: 8, 128>}]} {
    %c0_i32 = arith.constant 0 : i32
    %0 = arith.cmpi eq, %arg1, %c0_i32 : i32
    %1 = arith.extui %0 : i1 to i32
    %c0_i32_0 = arith.constant 0 : i32
    %2 = arith.cmpi ne, %1, %c0_i32_0 : i32
    scf.if %2 {
      %c0_8 = arith.constant 0 : index
      %c0_9 = arith.constant 0 : index
      %11 = vector.load %arg2[%c0_8, %c0_9] : memref<8x16xf32, #tpu.memory_space<vmem>>, vector<8x16xf32>
      %12 = arith.truncf %11 : vector<8x16xf32> to vector<8x16xbf16>
      %c0_10 = arith.constant 0 : index
      %c0_11 = arith.constant 0 : index
      %13 = vector.load %arg3[%c0_10, %c0_11] : memref<16x128xbf16, #tpu.memory_space<vmem>>, vector<16x128xbf16>
      %cst_12 = arith.constant dense<0.000000e+00> : vector<8x128xf32>
      %14 = tpu.matmul %12, %13, %cst_12 {dimension_numbers = #tpu.dot_dimension_numbers<[1], [0], [0], [1], [0, 0, 1, 1], [], []>} : vector<8x16xbf16>, vector<16x128xbf16>, vector<8x128xf32> -> vector<8x128xf32>
      %c0_13 = arith.constant 0 : index
      %c0_14 = arith.constant 0 : index
      %15 = vector.load %arg4[%c0_13, %c0_14] : memref<1x128xf32, #tpu.memory_space<vmem>>, vector<1x128xf32>
      %16 = vector.broadcast %15 : vector<1x128xf32> to vector<8x128xf32>
      %17 = arith.addf %14, %16 : vector<8x128xf32>
      %cst_15 = arith.constant 0.000000e+00 : f32
      %18 = vector.broadcast %cst_15 : f32 to vector<8x128xf32>
      %19 = arith.maximumf %17, %18 : vector<8x128xf32>
      %c0_16 = arith.constant 0 : index
      %c0_17 = arith.constant 0 : index
      %20 = vector.load %arg8[%c0_16, %c0_17] : memref<8x128xf32, #tpu.memory_space<vmem>>, vector<8x128xf32>
      tpu.vector_store %arg8[%c0_16, %c0_17], %19 {strides = array<i32>} : memref<8x128xf32, #tpu.memory_space<vmem>>, vector<8x128xf32>,
    } else {
    }
    %c0 = arith.constant 0 : index
    %c0_1 = arith.constant 0 : index
    %3 = vector.load %arg8[%c0, %c0_1] : memref<8x128xf32, #tpu.memory_space<vmem>>, vector<8x128xf32>
    %4 = arith.truncf %3 : vector<8x128xf32> to vector<8x128xbf16>
    %c0_2 = arith.constant 0 : index
    %c0_3 = arith.constant 0 : index
    %5 = vector.load %arg5[%c0_2, %c0_3] : memref<128x128xbf16, #tpu.memory_space<vmem>>, vector<128x128xbf16>
    %cst = arith.constant dense<0.000000e+00> : vector<8x128xf32>
    %6 = tpu.matmul %4, %5, %cst {dimension_numbers = #tpu.dot_dimension_numbers<[1], [0], [0], [1], [0, 0, 1, 1], [], []>} : vector<8x128xbf16>, vector<128x128xbf16>, vector<8x128xf32> -> vector<8x128xf32>
    %c0_4 = arith.constant 0 : index
    %c0_5 = arith.constant 0 : index
    %7 = vector.load %arg6[%c0_4, %c0_5] : memref<1x128xf32, #tpu.memory_space<vmem>>, vector<1x128xf32>
    %8 = vector.broadcast %7 : vector<1x128xf32> to vector<8x128xf32>
    %9 = arith.addf %6, %8 : vector<8x128xf32>
    %c0_6 = arith.constant 0 : index
    %c0_7 = arith.constant 0 : index
    %10 = vector.load %arg7[%c0_6, %c0_7] : memref<8x128xf32, #tpu.memory_space<vmem>>, vector<8x128xf32>
    tpu.vector_store %arg7[%c0_6, %c0_7], %9 {strides = array<i32>} : memref<8x128xf32, #tpu.memory_space<vmem>>, vector<8x128xf32>,
    return
  }
  func.func @transform_0(%arg0: i32, %arg1: i32) -> (i32, i32) {
    %c0_i32 = arith.constant 0 : i32
    %c0_i32_0 = arith.constant 0 : i32
    return %arg0, %c0_i32 : i32, i32
  }
  func.func @transform_1(%arg0: i32, %arg1: i32) -> (i32, i32) {
    %c0_i32 = arith.constant 0 : i32
    %c0_i32_0 = arith.constant 0 : i32
    %c0_i32_1 = arith.constant 0 : i32
    return %c0_i32, %c0_i32_0 : i32, i32
  }
  func.func @transform_2(%arg0: i32, %arg1: i32) -> (i32, i32) {
    %c0_i32 = arith.constant 0 : i32
    %c0_i32_0 = arith.constant 0 : i32
    %c0_i32_1 = arith.constant 0 : i32
    return %c0_i32, %c0_i32_0 : i32, i32
  }
  func.func @transform_3(%arg0: i32, %arg1: i32) -> (i32, i32) {
    %c0_i32 = arith.constant 0 : i32
    %c0_i32_0 = arith.constant 0 : i32
    return %c0_i32, %arg1 : i32, i32
  }
  func.func @transform_4(%arg0: i32, %arg1: i32) -> (i32, i32) {
    %c0_i32 = arith.constant 0 : i32
    %c0_i32_0 = arith.constant 0 : i32
    return %c0_i32, %arg1 : i32, i32
  }
  func.func @transform_5(%arg0: i32, %arg1: i32) -> (i32, i32) {
    %c0_i32 = arith.constant 0 : i32
    return %arg0, %arg1 : i32, i32
  }
}

</mosaic_0001>

<llo_original>
// kernel: tpu_custom_call.1
$region0: #{tpu_custom_call.1}
  #allocation0 [shape = 'u32[]', space=smem, size = 0x4, offset = 0x4, fixed_abs, tag = 'smem constant byte address 0x4 - core index']
  #allocation1 [shape = 'u32[144,128]{1,0:T(1,128)}', space=vmem, size = 0x12000, scoped, tag = 'internal scratch']
  #allocation2 [shape = 'f32[8,128]{1,0:T(8,128)}', space=vmem, size = 0x1000, scoped, tag = 'scratch operand']
  %s0 = inlined_call_operand.hbm [shape: f32[16,16], index: 0, kind: input, shape index: {}]
  %s1 = inlined_call_operand.hbm [shape: bf16[16,128], index: 1, kind: input, shape index: {}]
  %s2 = inlined_call_operand.vmem [shape: f32[1,128], index: 2, kind: input, shape index: {}]
  %s3 = inlined_call_operand.hbm [shape: bf16[128,128], index: 3, kind: input, shape index: {}]
  %s4 = inlined_call_operand.vmem [shape: f32[1,128], index: 4, kind: input, shape index: {}]
  %s5 = inlined_call_operand.hbm [shape: f32[16,128], index: 5, kind: output, shape index: {}]
  %s6 = sld [smem:[#allocation0]]
  $region69: #{tpu_custom_call.1} parent=0
    _
  %s8 = ssub.s32 1, %s6
  %s9 = scalar_select 0, %s8, %s6
  $region1: #{tpu_custom_call.1} parent=0
    #allocation3 [shape = 'u8[8192]{0}', space=vmem, size = 0x2000, scoped, tag = 'input window, operand 0']
    #allocation4 [shape = 's32[2]{0}', space=sflag, size = 0x8, scoped, tag = 'scoped memory for tpu_custom_call.1']
    #allocation5 [shape = 's32[2]{0}', space=sflag, size = 0x8, scoped, tag = 'scoped memory for tpu_custom_call.1']
    #allocation6 [shape = 'u8[4096]{0}', space=vmem, size = 0x1000, scoped, tag = 'input window, operand 1, single buffered']
    #allocation7 [shape = 's32[1]{0}', space=sflag, size = 0x4, scoped, tag = 'scoped memory for tpu_custom_call.1']
    #allocation8 [shape = 'u8[32768]{0}', space=vmem, size = 0x8000, scoped, tag = 'input window, operand 3, single buffered']
    #allocation9 [shape = 'u8[8192]{0}', space=vmem, size = 0x2000, scoped, tag = 'output window, operand 0']
    %10 = vsyncpa [#allocation4], 0
    %s11 = scalar_lea.sflag [#allocation4], 1
    %12 = vsyncpa %s11, 0
    %13 = vsyncpa [#allocation7], 0
    %14 = vsyncpa [#allocation5], 0
    %s15 = scalar_lea.sflag [#allocation5], 1
    %16 = vsyncpa %s15, 0
    loop: start=0, step=1, limit=4
    $region2: #{tpu_custom_call.1} parent=1 // loop_pre_header
      _
    $region3: #{tpu_custom_call.1} parent=1 // loop_header
      %s18 = sphi 0, %s22
      %p19 = scmp.ge.s32.totalorder %s18, 4
      %s25 = sphi 0, %s37
      %s26 = sphi 0, %s33
      %s27 = sphi 0, %s25
      %s28 = sphi 0, %s26
      %s29 = sphi 0, %s27
      %s30 = sphi 0, %s28
      %s40 = sphi 0, %s42
      %s43 = sphi 0, %s40
      %s44 = sphi 0, %s43
      %s60 = sphi 0, %s44
      %s64 = sphi 0, %s64
      %s66 = sphi 0, %s64
      %s67 = sphi 0, %s66
      %s81 = sphi 0, %s67
      %s85 = sphi 0, %s85
      %s87 = sphi 0, %s85
      %s88 = sphi 0, %s87
      %s102 = sphi 0, %s88
      %s108 = sphi 0, %s110
      %s111 = sphi 0, %s108
      %s112 = sphi 0, %s111
      %s128 = sphi 0, %s112
      %s134 = sphi 0, %s136
      %s137 = sphi 0, %s134
      %s138 = sphi 0, %s137
      %s154 = sphi 0, %s138
      %s162 = sphi 0, %s164
      %s165 = sphi 0, %s162
      %s166 = sphi 0, %s165
      %s182 = sphi 0, %s166
    $region4: #{tpu_custom_call.1} parent=1 // loop_header_branch
      %21 = sbr.rel (%p19) target = $region8
    $region5: #{tpu_custom_call.1} parent=1 // loop_body
      %s23 = ssub.s32 %s18, 1
      %s24 = ssub.s32 %s18, 2
      %s31 = sadd.s32 1, %s26
      %p32 = scmp.ge.s32.totalorder %s31, 1
      %s33 = scalar_select %p32, 0, %s31
      %s34 = sadd.s32 1, %s25
      %s35 = scalar_select %p32, %s34, %s25
      %p36 = scmp.ge.s32.totalorder %s35, 2
      %s37 = scalar_select %p36, 0, %s35
      %s38 = ssub.s32 %s25, %s37
      %p39 = scmp.eq.s32.totalorder %s38, 0
      %s41 = sadd.s32 %s40, 1
      %s42 = scalar_select %p39, %s40, %s41
      %p45 = pneg %p39
      %p46 = scmp.eq.s32.totalorder %s18, 1
      %p47 = por %p45, %p46
      %p48 = scmp.ne.s32.totalorder %s40, %s43
      %p49 = scmp.eq.s32.totalorder %s18, 0
      %p50 = por %p48, %p49
      %p51 = scmp.ne.s32.totalorder %s40, %s43
      %p52 = scmp.eq.s32.totalorder %s23, 1
      %p53 = por %p51, %p52
      %p54 = scmp.ne.s32.totalorder %s43, %s44
      %p55 = scmp.eq.s32.totalorder %s23, 0
      %p56 = por %p54, %p55
      %p57 = scmp.ne.s32.totalorder %s43, %s44
      %p58 = scmp.eq.s32.totalorder %s24, 1
      %p59 = por %p57, %p58
      %p61 = scmp.ne.s32.totalorder %s44, %s60
      %p62 = scmp.eq.s32.totalorder %s24, 0
      %p63 = por %p61, %p62
      %s65 = sadd.s32 %s64, 1
      %p68 = scmp.eq.s32.totalorder %s18, 1
      %p69 = scmp.ne.s32.totalorder %s64, %s66
      %p70 = scmp.eq.s32.totalorder %s18, 0
      %p71 = por %p69, %p70
      %p72 = scmp.ne.s32.totalorder %s64, %s66
      %p73 = scmp.eq.s32.totalorder %s23, 1
      %p74 = por %p72, %p73
      %p75 = scmp.ne.s32.totalorder %s66, %s67
      %p76 = scmp.eq.s32.totalorder %s23, 0
      %p77 = por %p75, %p76
      %p78 = scmp.ne.s32.totalorder %s66, %s67
      %p79 = scmp.eq.s32.totalorder %s24, 1
      %p80 = por %p78, %p79
      %p82 = scmp.ne.s32.totalorder %s67, %s81
      %p83 = scmp.eq.s32.totalorder %s24, 0
      %p84 = por %p82, %p83
      %s86 = sadd.s32 %s85, 1
      %p89 = scmp.eq.s32.totalorder %s18, 1
      %p90 = scmp.ne.s32.totalorder %s85, %s87
      %p91 = scmp.eq.s32.totalorder %s18, 0
      %p92 = por %p90, %p91
      %p93 = scmp.ne.s32.totalorder %s85, %s87
      %p94 = scmp.eq.s32.totalorder %s23, 1
      %p95 = por %p93, %p94
      %p96 = scmp.ne.s32.totalorder %s87, %s88
      %p97 = scmp.eq.s32.totalorder %s23, 0
      %p98 = por %p96, %p97
      %p99 = scmp.ne.s32.totalorder %s87, %s88
      %p100 = scmp.eq.s32.totalorder %s24, 1
      %p101 = por %p99, %p100
      %p103 = scmp.ne.s32.totalorder %s88, %s102
      %p104 = scmp.eq.s32.totalorder %s24, 0
      %p105 = por %p103, %p104
      %s106 = ssub.s32 %s26, %s33
      %p107 = scmp.eq.s32.totalorder %s106, 0
      %s109 = sadd.s32 %s108, 1
      %s110 = scalar_select %p107, %s108, %s109
      %p113 = pneg %p107
      %p114 = scmp.eq.s32.totalorder %s18, 1
      %p115 = por %p113, %p114
      %p116 = scmp.ne.s32.totalorder %s108, %s111
      %p117 = scmp.eq.s32.totalorder %s18, 0
      %p118 = por %p116, %p117
      %p119 = scmp.ne.s32.totalorder %s108, %s111
      %p120 = scmp.eq.s32.totalorder %s23, 1
      %p121 = por %p119, %p120
      %p122 = scmp.ne.s32.totalorder %s111, %s112
      %p123 = scmp.eq.s32.totalorder %s23, 0
      %p124 = por %p122, %p123
      %p125 = scmp.ne.s32.totalorder %s111, %s112
      %p126 = scmp.eq.s32.totalorder %s24, 1
      %p127 = por %p125, %p126
      %p129 = scmp.ne.s32.totalorder %s112, %s128
      %p130 = scmp.eq.s32.totalorder %s24, 0
      %p131 = por %p129, %p130
      %s132 = ssub.s32 %s26, %s33
      %p133 = scmp.eq.s32.totalorder %s132, 0
      %s135 = sadd.s32 %s134, 1
      %s136 = scalar_select %p133, %s134, %s135
      %p139 = pneg %p133
      %p140 = scmp.eq.s32.totalorder %s18, 1
      %p141 = por %p139, %p140
      %p142 = scmp.ne.s32.totalorder %s134, %s137
      %p143 = scmp.eq.s32.totalorder %s18, 0
      %p144 = por %p142, %p143
      %p145 = scmp.ne.s32.totalorder %s134, %s137
      %p146 = scmp.eq.s32.totalorder %s23, 1
      %p147 = por %p145, %p146
      %p148 = scmp.ne.s32.totalorder %s137, %s138
      %p149 = scmp.eq.s32.totalorder %s23, 0
      %p150 = por %p148, %p149
      %p151 = scmp.ne.s32.totalorder %s137, %s138
      %p152 = scmp.eq.s32.totalorder %s24, 1
      %p153 = por %p151, %p152
      %p155 = scmp.ne.s32.totalorder %s138, %s154
      %p156 = scmp.eq.s32.totalorder %s24, 0
      %p157 = por %p155, %p156
      %s158 = ssub.s32 %s25, %s37
      %s159 = ssub.s32 %s26, %s33
      %s160 = sor.u32 %s158, %s159
      %p161 = scmp.eq.s32.totalorder %s160, 0
      %s163 = sadd.s32 %s162, 1
      %s164 = scalar_select %p161, %s162, %s163
      %p167 = pneg %p161
      %p168 = scmp.eq.s32.totalorder %s18, 1
      %p169 = por %p167, %p168
      %p170 = scmp.ne.s32.totalorder %s162, %s165
      %p171 = scmp.eq.s32.totalorder %s18, 0
      %p172 = por %p170, %p171
      %p173 = scmp.ne.s32.totalorder %s162, %s165
      %p174 = scmp.eq.s32.totalorder %s23, 1
      %p175 = por %p173, %p174
      %p176 = scmp.ne.s32.totalorder %s165, %s166
      %p177 = scmp.eq.s32.totalorder %s23, 0
      %p178 = por %p176, %p177
      %p179 = scmp.ne.s32.totalorder %s165, %s166
      %p180 = scmp.eq.s32.totalorder %s24, 1
      %p181 = por %p179, %p180
      %p183 = scmp.ne.s32.totalorder %s166, %s182
      %p184 = scmp.eq.s32.totalorder %s24, 0
      %p185 = por %p183, %p184
      %p186 = scmp.le.s32.totalorder 1, %s18
      %p187 = scmp.lt.s32.totalorder %s18, 3
      %p188 = pnand %p186, %p187
      %p189 = pneg %p188
      // Predicated region
      $region9: #{tpu_custom_call.1} parent=5 // pred_check
        _
      $region10: #{tpu_custom_call.1} parent=5 // pred_check_branch
        %191 = sbr.rel (%p188) target = $region12
      $region11: #{tpu_custom_call.1} parent=5 // pred_region
        %s192 = ssub.s32 %s18, 1
        // Predicated region
        $region13: #{tpu_custom_call.1} parent=11 // pred_check
          %p193 = pneg %p77
        $region14: #{tpu_custom_call.1} parent=11 // pred_check_branch
          %195 = sbr.rel (%p193) target = $region16
        $region15: #{tpu_custom_call.1} parent=11 // pred_region
          %s197 = ssub.s32 128, 128
          %198 = vsyncadd [#allocation7], %s197
          %s199 = sshll.u32 [#allocation6], 4
          %s200 = int_to_ptr.vmem [resolvable:$true] %s199
          %205 = dma.hbm_to_vmem [thread:$0]  %s1, 128, %s200, [#allocation7], 64, 64, 4
        $region16: #{tpu_custom_call.1} parent=11 // pred_fallthru
          _
        // Predicated region
        $region17: #{tpu_custom_call.1} parent=11 // pred_check
          %p206 = pneg %p98
        $region18: #{tpu_custom_call.1} parent=11 // pred_check_branch
          %208 = sbr.rel (%p206) target = $region20
        $region19: #{tpu_custom_call.1} parent=11 // pred_region
          _
        $region20: #{tpu_custom_call.1} parent=11 // pred_fallthru
          _
        // Predicated region
        $region21: #{tpu_custom_call.1} parent=11 // pred_check
          %p209 = pneg %p124
        $region22: #{tpu_custom_call.1} parent=11 // pred_check_branch
          %211 = sbr.rel (%p209) target = $region24
        $region23: #{tpu_custom_call.1} parent=11 // pred_region
          %s213 = ssub.s32 1024, 1024
          %214 = vsyncadd [#allocation7], %s213
          %s215 = smul.addr %s28, 64
          %s216 = scalar_lea.hbm %s3, %s215
          %s217 = sshll.u32 [#allocation8], 4
          %s218 = int_to_ptr.vmem [resolvable:$true] %s217
          %223 = dma.hbm_to_vmem [thread:$0]  %s216, 1024, %s218, [#allocation7], 64, 64, 4
        $region24: #{tpu_custom_call.1} parent=11 // pred_fallthru
          _
        // Predicated region
        $region25: #{tpu_custom_call.1} parent=11 // pred_check
          %p224 = pneg %p150
        $region26: #{tpu_custom_call.1} parent=11 // pred_check_branch
          %226 = sbr.rel (%p224) target = $region28
        $region27: #{tpu_custom_call.1} parent=11 // pred_region
          %p227 = scmp.lt.s32.totalorder %s28, 0
          %s228 = scalar_select %p227, %s28, 0
          %s229 = scalar_lea.vmem %s4, %s228
        $region28: #{tpu_custom_call.1} parent=11 // pred_fallthru
          _
      $region12: #{tpu_custom_call.1} parent=5 // pred_fallthru
        _
      %p230 = scmp.lt.s32.totalorder %s18, 2
      // Predicated region
      $region29: #{tpu_custom_call.1} parent=5 // pred_check
        %p231 = pneg %p230
      $region30: #{tpu_custom_call.1} parent=5 // pred_check_branch
        %233 = sbr.rel (%p231) target = $region32
      $region31: #{tpu_custom_call.1} parent=5 // pred_region
        // Predicated region
        $region33: #{tpu_custom_call.1} parent=31 // pred_check
          %p234 = pneg %p50
        $region34: #{tpu_custom_call.1} parent=31 // pred_check_branch
          %236 = sbr.rel (%p234) target = $region36
        $region35: #{tpu_custom_call.1} parent=31 // pred_region
          %s237 = sand.u32 %s40, 1
          %s238 = scalar_lea.sflag [#allocation4], %s237
          %s239 = sand.u32 %s40, 1
          %s240 = smul.addr %s239, 8
          %s241 = scalar_lea.vmem [#allocation3], %s240
          %s243 = ssub.s32 128, 128
          %244 = vsyncadd %s238, %s243
          %s245 = smul.addr %s25, 128
          %s246 = scalar_lea.hbm %s0, %s245
          %s248 = sshll.u32 %s241, 4
          %s249 = int_to_ptr.vmem [resolvable:$true] %s248
          %251 = dma.hbm_to_vmem [thread:$0]  %s246, 128, %s249, %s238
        $region36: #{tpu_custom_call.1} parent=31 // pred_fallthru
          _
      $region32: #{tpu_custom_call.1} parent=5 // pred_fallthru
        _
      %p252 = scmp.le.s32.totalorder 1, %s18
      %p253 = scmp.lt.s32.totalorder %s18, 3
      %p254 = pnand %p252, %p253
      %p255 = pneg %p254
      // Predicated region
      $region37: #{tpu_custom_call.1} parent=5 // pred_check
        _
      $region38: #{tpu_custom_call.1} parent=5 // pred_check_branch
        %257 = sbr.rel (%p254) target = $region40
      $region39: #{tpu_custom_call.1} parent=5 // pred_region
        %s258 = ssub.s32 %s18, 1
        %s259 = sand.u32 %s43, 1
        %s260 = scalar_lea.sflag [#allocation4], %s259
        %s261 = sand.u32 %s43, 1
        %s262 = smul.addr %s261, 8
        %s263 = scalar_lea.vmem [#allocation3], %s262
        // Predicated region
        $region41: #{tpu_custom_call.1} parent=39 // pred_check
          %p264 = pneg %p56
        $region42: #{tpu_custom_call.1} parent=39 // pred_check_branch
          %266 = sbr.rel (%p264) target = $region44
        $region43: #{tpu_custom_call.1} parent=39 // pred_region
          %267 = dma.done %s260, 128
        $region44: #{tpu_custom_call.1} parent=39 // pred_fallthru
          _
        // Predicated region
        $region45: #{tpu_custom_call.1} parent=39 // pred_check
          %p268 = pneg %p77
        $region46: #{tpu_custom_call.1} parent=39 // pred_check_branch
          %270 = sbr.rel (%p268) target = $region48
        $region47: #{tpu_custom_call.1} parent=39 // pred_region
          %271 = dma.done [#allocation7], 128
        $region48: #{tpu_custom_call.1} parent=39 // pred_fallthru
          _
        // Predicated region
        $region49: #{tpu_custom_call.1} parent=39 // pred_check
          %p272 = pneg %p124
        $region50: #{tpu_custom_call.1} parent=39 // pred_check_branch
          %274 = sbr.rel (%p272) target = $region52
        $region51: #{tpu_custom_call.1} parent=39 // pred_region
          %275 = dma.done [#allocation7], 1024
        $region52: #{tpu_custom_call.1} parent=39 // pred_fallthru
          _
        %s276 = sand.u32 %s43, 1
        %s277 = scalar_lea.sflag [#allocation4], %s276
        %s278 = sand.u32 %s43, 1
        %s279 = smul.addr %s278, 8
        %s280 = scalar_lea.vmem [#allocation3], %s279
        %p281 = pneg %p56
        %p282 = pneg %p53
        %p283 = pneg %p77
        %p284 = pneg %p74
        %p285 = pneg %p98
        %p286 = pneg %p95
        %p287 = pneg %p124
        %p288 = pneg %p121
        %p289 = scmp.lt.s32.totalorder %s28, 0
        %s290 = scalar_select %p289, %s28, 0
        %s291 = scalar_lea.vmem %s4, %s290
        %p292 = pneg %p150
        %p293 = pneg %p147
        %p294 = pneg %p178
        %p295 = pneg %p175
        %s296 = sand.u32 %s165, 1
        %s297 = scalar_lea.sflag [#allocation5], %s296
        %s298 = sand.u32 %s165, 1
        %s299 = smul.addr %s298, 8
        %s300 = scalar_lea.vmem [#allocation9], %s299
        %p301 = scmp.lt.s32.totalorder %s28, 0
        %s302 = scalar_select %p301, %s28, 0
        %s303 = scalar_lea.vmem %s4, %s302
        %p305 = scmp.eq.s32.totalorder %s28, 0
        // Predicated region
        $region53: #{tpu_custom_call.1} parent=39 // pred_check
          %p306 = pneg %p305
        $region54: #{tpu_custom_call.1} parent=39 // pred_check_branch
          %308 = sbr.rel (%p306) target = $region56
        $region55: #{tpu_custom_call.1} parent=39 // pred_region
          %v309 = vld [vmem:[%s263] sm:$0xff]
          %v310 = vpack.c.bf16 %v309, %v309
          %v311 = vld [vmem:[#allocation6] sm:$0xf]
          %v312 = vld [vmem:[#allocation6 + $0x4] sm:$0xf]
          %v313 = vld [vmem:[%s2] sm:$0x1]
          %v315 = vlaneseq
          %v316 = vshrl.u32 %v315, 7
          %v317 = vsub.s32 0, %v316
          %v318 = vrot.slane %v313, %v317
          %v322 = vunpack.c.l.b16 %v311
          %v323 = vunpack.c.l.b16 %v312
          %v324 = vpack.c.b16 %v323, %v322
          %vm326 = vcmask 130048
          %v328 = vsel %vm326, %v310, 0
          %330 = vmatprep.subr.bf16.mxu0 0
          %331 = vmatpush1.bf16.msra.mxu0 %v324
          %332 = vmatprep.subr.bf16.mxu0 0
          %333 = vmatpush1.bf16.msra.mxu0 0
          %334 = vmatprep.subr.bf16.mxu0 0
          %335 = vmatpush1.bf16.msra.mxu0 0
          %336 = vmatprep.subr.bf16.mxu0 0
          %337 = vmatpush1.bf16.msra.mxu0 0
          %338 = vmatprep.subr.bf16.mxu0 0
          %339 = vmatpush1.bf16.msra.mxu0 0
          %340 = vmatprep.subr.bf16.mxu0 0
          %341 = vmatpush1.bf16.msra.mxu0 0
          %342 = vmatprep.subr.bf16.mxu0 0
          %343 = vmatpush1.bf16.msra.mxu0 0
          %344 = vmatprep.subr.bf16.mxu0 0
          %345 = vmatpush1.bf16.msra.mxu0 0
          %346 = vmatprep.subr.bf16.mxu0 0
          %347 = vmatpush1.bf16.msra.mxu0 0
          %348 = vmatprep.subr.bf16.mxu0 0
          %349 = vmatpush1.bf16.msra.mxu0 0
          %350 = vmatprep.subr.bf16.mxu0 0
          %351 = vmatpush1.bf16.msra.mxu0 0
          %352 = vmatprep.subr.bf16.mxu0 0
          %353 = vmatpush1.bf16.msra.mxu0 0
          %354 = vmatprep.subr.bf16.mxu0 0
          %355 = vmatpush1.bf16.msra.mxu0 0
          %356 = vmatprep.subr.bf16.mxu0 0
          %357 = vmatpush1.bf16.msra.mxu0 0
          %358 = vmatprep.subr.bf16.mxu0 0
          %359 = vmatpush1.bf16.msra.mxu0 0
          %360 = vmatprep.subr.bf16.mxu0 0
          %361 = vmatpush1.bf16.msra.mxu0 0
          %362 = vmatprep.mubr.bf16.mxu0 0
          %363 = vmatmul.mubr.bf16.gmra.mrb[0].mxu0 %v328
          %v364 = vpop.f32.mrb[0].mxu0
          %v365 = vadd.f32 %v318, %v364
          %v366 = vpop.f32.mrb[0].mxu0
          %v367 = vpop.f32.mrb[0].mxu0
          %v368 = vpop.f32.mrb[0].mxu0
          %369 = vdwg.mxu0
          %v370 = vmax.f32 %v365, 0.0
          %371 = vst [vmem:[#allocation2] sm:$0xff] %v370
        $region56: #{tpu_custom_call.1} parent=39 // pred_fallthru
          _
        %v372 = vld [vmem:[#allocation2] sm:$0xff]
        %v373 = vpack.c.bf16 %v372, %v372
        %v374 = vld [vmem:[#allocation8] sm:$0xf]
        %v375 = vld [vmem:[#allocation8 + $0x4] sm:$0xf]
        %v376 = vld [vmem:[#allocation8 + $0x8] sm:$0xf]
        %v377 = vld [vmem:[#allocation8 + $0xc] sm:$0xf]
        %v378 = vld [vmem:[#allocation8 + $0x10] sm:$0xf]
        %v379 = vld [vmem:[#allocation8 + $0x14] sm:$0xf]
        %v380 = vld [vmem:[#allocation8 + $0x18] sm:$0xf]
        %v381 = vld [vmem:[#allocation8 + $0x1c] sm:$0xf]
        %v382 = vld [vmem:[#allocation8 + $0x20] sm:$0xf]
        %v383 = vld [vmem:[#allocation8 + $0x24] sm:$0xf]
        %v384 = vld [vmem:[#allocation8 + $0x28] sm:$0xf]
        %v385 = vld [vmem:[#allocation8 + $0x2c] sm:$0xf]
        %v386 = vld [vmem:[#allocation8 + $0x30] sm:$0xf]
        %v387 = vld [vmem:[#allocation8 + $0x34] sm:$0xf]
        %v388 = vld [vmem:[#allocation8 + $0x38] sm:$0xf]
        %v389 = vld [vmem:[#allocation8 + $0x3c] sm:$0xf]
        %v390 = vld [vmem:[%s303] sm:$0x1]
        %v392 = vlaneseq
        %v393 = vshrl.u32 %v392, 7
        %v394 = vsub.s32 0, %v393
        %v395 = vrot.slane %v390, %v394
        %v413 = vunpack.c.l.b16 %v374
        %v414 = vunpack.c.l.b16 %v375
        %v415 = vunpack.c.l.b16 %v376
        %v416 = vunpack.c.l.b16 %v377
        %v417 = vunpack.c.l.b16 %v378
        %v418 = vunpack.c.l.b16 %v379
        %v419 = vunpack.c.l.b16 %v380
        %v420 = vunpack.c.l.b16 %v381
        %v421 = vunpack.c.l.b16 %v382
        %v422 = vunpack.c.l.b16 %v383
        %v423 = vunpack.c.l.b16 %v384
        %v424 = vunpack.c.l.b16 %v385
        %v425 = vunpack.c.l.b16 %v386
        %v426 = vunpack.c.l.b16 %v387
        %v427 = vunpack.c.l.b16 %v388
        %v428 = vunpack.c.l.b16 %v389
        %v429 = vpack.c.b16 %v414, %v413
        %v430 = vpack.c.b16 %v416, %v415
        %v431 = vpack.c.b16 %v418, %v417
        %v432 = vpack.c.b16 %v420, %v419
        %v433 = vpack.c.b16 %v422, %v421
        %v434 = vpack.c.b16 %v424, %v423
        %v435 = vpack.c.b16 %v426, %v425
        %v436 = vpack.c.b16 %v428, %v427
        %445 = vmatprep.subr.bf16.mxu0 0
        %446 = vmatpush1.bf16.msra.mxu0 %v429
        %447 = vmatprep.subr.bf16.mxu0 0
        %448 = vmatpush1.bf16.msra.mxu0 %v430
        %449 = vmatprep.subr.bf16.mxu0 0
        %450 = vmatpush1.bf16.msra.mxu0 %v431
        %451 = vmatprep.subr.bf16.mxu0 0
        %452 = vmatpush1.bf16.msra.mxu0 %v432
        %453 = vmatprep.subr.bf16.mxu0 0
        %454 = vmatpush1.bf16.msra.mxu0 %v433
        %455 = vmatprep.subr.bf16.mxu0 0
        %456 = vmatpush1.bf16.msra.mxu0 %v434
        %457 = vmatprep.subr.bf16.mxu0 0
        %458 = vmatpush1.bf16.msra.mxu0 %v435
        %459 = vmatprep.subr.bf16.mxu0 0
        %460 = vmatpush1.bf16.msra.mxu0 %v436
        %461 = vmatprep.subr.bf16.mxu0 0
        %462 = vmatpush1.bf16.msra.mxu0 0
        %463 = vmatprep.subr.bf16.mxu0 0
        %464 = vmatpush1.bf16.msra.mxu0 0
        %465 = vmatprep.subr.bf16.mxu0 0
        %466 = vmatpush1.bf16.msra.mxu0 0
        %467 = vmatprep.subr.bf16.mxu0 0
        %468 = vmatpush1.bf16.msra.mxu0 0
        %469 = vmatprep.subr.bf16.mxu0 0
        %470 = vmatpush1.bf16.msra.mxu0 0
        %471 = vmatprep.subr.bf16.mxu0 0
        %472 = vmatpush1.bf16.msra.mxu0 0
        %473 = vmatprep.subr.bf16.mxu0 0
        %474 = vmatpush1.bf16.msra.mxu0 0
        %475 = vmatprep.subr.bf16.mxu0 0
        %476 = vmatpush1.bf16.msra.mxu0 0
        %477 = vmatprep.mubr.bf16.mxu0 0
        %478 = vmatmul.mubr.bf16.gmra.mrb[0].mxu0 %v373
        %v479 = vpop.f32.mrb[0].mxu0
        %v480 = vadd.f32 %v395, %v479
        %v481 = vpop.f32.mrb[0].mxu0
        %v482 = vpop.f32.mrb[0].mxu0
        %v483 = vpop.f32.mrb[0].mxu0
        %484 = vdwg.mxu0
        %485 = vst [vmem:[%s300] sm:$0xff] %v480
        %s486 = sand.u32 %s165, 1
        %s487 = scalar_lea.sflag [#allocation5], %s486
        %s488 = sand.u32 %s165, 1
        %s489 = smul.addr %s488, 8
        %s490 = scalar_lea.vmem [#allocation9], %s489
        // Predicated region
        $region57: #{tpu_custom_call.1} parent=39 // pred_check
          %p491 = pneg %p175
        $region58: #{tpu_custom_call.1} parent=39 // pred_check_branch
          %493 = sbr.rel (%p491) target = $region60
        $region59: #{tpu_custom_call.1} parent=39 // pred_region
          %s495 = ssub.s32 128, 128
          %496 = vsyncadd %s487, %s495
          %s497 = sadd.s32 %s28, %s27
          %s498 = smul.addr %s497, 128
          %s499 = scalar_lea.hbm %s5, %s498
          %s501 = sshll.u32 %s490, 4
          %s502 = int_to_ptr.vmem [resolvable:$true] %s501
          %504 = dma.vmem_to_hbm [thread:$0]  %s502, 128, %s499, %s487
        $region60: #{tpu_custom_call.1} parent=39 // pred_fallthru
          _
      $region40: #{tpu_custom_call.1} parent=5 // pred_fallthru
        _
      %p505 = scmp.le.s32.totalorder 2, %s18
      // Predicated region
      $region61: #{tpu_custom_call.1} parent=5 // pred_check
        %p506 = pneg %p505
      $region62: #{tpu_custom_call.1} parent=5 // pred_check_branch
        %508 = sbr.rel (%p506) target = $region64
      $region63: #{tpu_custom_call.1} parent=5 // pred_region
        %s509 = ssub.s32 %s18, 2
        // Predicated region
        $region65: #{tpu_custom_call.1} parent=63 // pred_check
          %p510 = pneg %p181
        $region66: #{tpu_custom_call.1} parent=63 // pred_check_branch
          %512 = sbr.rel (%p510) target = $region68
        $region67: #{tpu_custom_call.1} parent=63 // pred_region
          %s513 = sand.u32 %s166, 1
          %s514 = scalar_lea.sflag [#allocation5], %s513
          %s515 = sand.u32 %s166, 1
          %s516 = smul.addr %s515, 8
          %s517 = scalar_lea.vmem [#allocation9], %s516
          %518 = dma.done %s514, 128
        $region68: #{tpu_custom_call.1} parent=63 // pred_fallthru
          _
      $region64: #{tpu_custom_call.1} parent=5 // pred_fallthru
        _
    $region6: #{tpu_custom_call.1} parent=1 // loop_footer
      %s22 = sadd.s32 1, %s18
    $region7: #{tpu_custom_call.1} parent=1 // loop_footer_branch
      %17 = sbr.rel target = $region3
    $region8: #{tpu_custom_call.1} parent=1 // loop_exit
      _
    %519 = vsyncpa [#allocation4], 1
    %s520 = scalar_lea.sflag [#allocation4], 1
    %521 = vsyncpa %s520, 1
    %522 = vsyncpa [#allocation7], 1
    %523 = vsyncpa [#allocation5], 1
    %s524 = scalar_lea.sflag [#allocation5], 1
    %525 = vsyncpa %s524, 1

</llo_original>
